<compile_context>
chip_gen: v7x
topology: tpu7x:2x2x1
jax: 0.10.0
libtpu: 0.0.40
codegen_flags: <defaults>
</compile_context>

<pallas_src>
import jax
import jax.numpy as jnp
import numpy as np
from jax.experimental import pallas as pl
from jax.experimental.pallas import tpu as pltpu

N = 16        # number of points
F = 32        # irreps "8x0e + 8x1e" -> 8 scalars + 8 vectors = 32 channels
T = 2         # number of SE(3) transforms (rows of Ts)
FAUG = F + 4  # augmented LHS width: features + xyz + homogeneous 1
FO = 64       # per-transform output block width (F + 3 padded up so T*FO >= 128)


def _quat_to_rotmat(q):
    """(w, x, y, z) unit quaternion -> (3, 3) rotation matrix acting on xyz."""
    # TODO(synk): verify scalar-first quaternion convention against diffusion_edf's
    # TransformFeatureQuaternion / transform_points (in-file reference is self-consistent).
    w, x, y, z = q[0], q[1], q[2], q[3]
    return jnp.array([
        [1 - 2 * (y * y + z * z), 2 * (x * y - z * w), 2 * (x * z + y * w)],
        [2 * (x * y + z * w), 1 - 2 * (x * x + z * z), 2 * (y * z - x * w)],
        [2 * (x * z - y * w), 2 * (y * z + x * w), 1 - 2 * (x * x + y * y)],
    ], dtype=jnp.float32)


def _wigner_blockdiag(R):
    """Block-diagonal irrep representation of R for irreps '8x0e + 8x1e'."""
    perm = jnp.array([1, 2, 0])              # e3nn l=1 basis order (y, z, x)
    D1 = R[perm][:, perm]                    # P R P^T
    D = jnp.zeros((F, F), dtype=jnp.float32)
    D = D.at[:8, :8].set(jnp.eye(8, dtype=jnp.float32))                 # 8x0e
    D = D.at[8:, 8:].set(jnp.kron(jnp.eye(8, dtype=jnp.float32), D1))   # 8x1e
    return D


def _per_transform_weight(D, R, t):
    """Packed RHS block for one transform: [f|x|1] @ Wt = [D f | R x + t | 0-pad]."""
    Wt = jnp.zeros((FAUG, FO), dtype=jnp.float32)
    Wt = Wt.at[:F, :F].set(D.T)                  # feature rotation (f @ D^T)
    Wt = Wt.at[F:F + 3, F:F + 3].set(R.T)        # point rotation   (x @ R^T)
    Wt = Wt.at[F + 3, F:F + 3].set(t)            # translation via homogeneous 1
    return Wt


def _transform_pcd_kernel(fx_ref, w_ref, out_ref):
    # Single MXU matmul: (tile_n, FAUG) @ (FAUG, T*FO) -> lane-dense (tile_n, T*FO).
    out_ref[...] = jnp.dot(fx_ref[...], w_ref[...],
                           preferred_element_type=jnp.float32)


def _round_up(a, m):
    return (a + m - 1) // m * m


def transform_pcd(x, f, b, w, Ts, *, tile_n=256):
    assert Ts.ndim == 2 and Ts.shape[-1] == 7, f"{Ts.shape}"
    nT = Ts.shape[0]
    n = x.shape[0]

    q = Ts[:, :4]
    q = q / jnp.linalg.norm(q, axis=-1, keepdims=True)
    trans = Ts[:, 4:]

    # Host-side O(T) glue: rotation matrices, Wigner-D blocks, packed weight matrix.
    R = jax.vmap(_quat_to_rotmat)(q)                       # (T, 3, 3)
    D = jax.vmap(_wigner_blockdiag)(R)                     # (T, F, F)
    Wt = jax.vmap(_per_transform_weight)(D, R, trans)      # (T, FAUG, FO)
    Wmat = jnp.transpose(Wt, (1, 0, 2)).reshape(FAUG, nT * FO)

    # Augmented point-major LHS: [f | x | 1].
    fx = jnp.concatenate(
        [f.astype(jnp.float32), x.astype(jnp.float32),
         jnp.ones((n, 1), jnp.float32)], axis=-1)          # (N, FAUG)

    tile_n = min(tile_n, _round_up(n, 8))
    n_pad = _round_up(n, tile_n)
    if n_pad != n:
        fx = jnp.pad(fx, ((0, n_pad - n), (0, 0)))

    out = pl.pallas_call(
        _transform_pcd_kernel,
        grid=(n_pad // tile_n,),
        in_specs=[
            pl.BlockSpec((tile_n, FAUG), lambda i: (i, 0)),
            pl.BlockSpec((FAUG, nT * FO), lambda i: (0, 0)),   # resident across N tiles
        ],
        out_specs=pl.BlockSpec((tile_n, nT * FO), lambda i: (i, 0)),
        out_shape=jax.ShapeDtypeStruct((n_pad, nT * FO), jnp.float32),
        compiler_params=pltpu.CompilerParams(
            dimension_semantics=("parallel",)),
    )(fx, Wmat)

    out = out[:n].reshape(n, nT, FO).transpose(1, 0, 2)    # (T, N, FO)
    f_out = out[:, :, :F]                                  # (T, N, F)
    x_out = out[:, :, F:F + 3]                             # (T, N, 3)

    # Pure expand semantics -> zero-compute broadcasts in the wrapper (not in kernel).
    b_out = jnp.broadcast_to(b[None, :], (nT, n))
    w_out = None if w is None else jnp.broadcast_to(w[None, :], (nT, n))
    # TODO(synk): the `irreps is None` branch of TransformPcd (f.expand only) is not
    # exercised; it reduces to a wrapper-side broadcast with no kernel work.
    return x_out, f_out, b_out, w_out


if __name__ == "__main__":
    key = jax.random.PRNGKey(0)
    kx, kf, kw, kq, kt = jax.random.split(key, 5)

    x = jax.random.normal(kx, (N, 3), jnp.float32)           # point positions
    f = jax.random.normal(kf, (N, F), jnp.float32)           # point features
    b = jnp.concatenate([jnp.zeros(N // 2, jnp.int32),       # batch indices
                         jnp.ones(N - N // 2, jnp.int32)])
    w = jax.random.uniform(kw, (N,), jnp.float32)             # point weights
    q = jax.random.normal(kq, (T, 4), jnp.float32)
    q = q / jnp.linalg.norm(q, axis=-1, keepdims=True)
    trans = jax.random.normal(kt, (T, 3), jnp.float32)
    Ts = jnp.concatenate([q, trans], axis=-1)                 # (T, 7)

    x_out, f_out, b_out, w_out = jax.block_until_ready(
        transform_pcd(x, f, b, w, Ts))

    # Pure-JAX reference check
    R = jax.vmap(_quat_to_rotmat)(q)
    D = jax.vmap(_wigner_blockdiag)(R)
    x_ref = jnp.einsum("tij,nj->tni", R, x) + trans[:, None, :]
    f_ref = jnp.einsum("tij,nj->tni", D, f)
    assert x_out.shape == (T, N, 3) and f_out.shape == (T, N, F)
    assert np.allclose(np.asarray(x_out), np.asarray(x_ref), atol=1e-5)
    assert np.allclose(np.asarray(f_out), np.asarray(f_ref), atol=1e-5)
    assert np.array_equal(np.asarray(b_out), np.tile(np.asarray(b)[None], (T, 1)))
    assert np.allclose(np.asarray(w_out), np.tile(np.asarray(w)[None], (T, 1)))

    print("KERNEL_OK")
</pallas_src>

<mosaic_0001>
module attributes {stable_mosaic.version = 11 : i64} {
  func.func @_transform_pcd_kernel(%arg0: i32, %arg1: memref<16x36xf32, #tpu.memory_space<vmem>>, %arg2: memref<36x128xf32, #tpu.memory_space<vmem>>, %arg3: memref<16x128xf32, #tpu.memory_space<vmem>>) attributes {dimension_semantics = [#tpu.dimension_semantics<parallel>], iteration_bounds = array<i64: 1>, scalar_prefetch = 0 : i64, scratch_operands = 0 : i64, tpu.core_type = #tpu.core_type<tc>, window_params = [{transform_indices = @transform_0, window_bounds = array<i64: 16, 36>}, {pipeline_mode = #tpu.pipeline_mode<synchronous>, transform_indices = @transform_1, window_bounds = array<i64: 36, 128>}, {transform_indices = @transform_2, window_bounds = array<i64: 16, 128>}]} {
    %c0 = arith.constant 0 : index
    %c0_0 = arith.constant 0 : index
    %0 = vector.load %arg1[%c0, %c0_0] : memref<16x36xf32, #tpu.memory_space<vmem>>, vector<16x36xf32>
    %c0_1 = arith.constant 0 : index
    %c0_2 = arith.constant 0 : index
    %1 = vector.load %arg2[%c0_1, %c0_2] : memref<36x128xf32, #tpu.memory_space<vmem>>, vector<36x128xf32>
    %cst = arith.constant dense<0.000000e+00> : vector<16x128xf32>
    %2 = tpu.matmul %0, %1, %cst {dimension_numbers = #tpu.dot_dimension_numbers<[1], [0], [0], [1], [0, 0, 1, 1], [], []>} : vector<16x36xf32>, vector<36x128xf32>, vector<16x128xf32> -> vector<16x128xf32>
    %c0_3 = arith.constant 0 : index
    %c0_4 = arith.constant 0 : index
    %3 = vector.load %arg3[%c0_3, %c0_4] : memref<16x128xf32, #tpu.memory_space<vmem>>, vector<16x128xf32>
    tpu.vector_store %arg3[%c0_3, %c0_4], %2 {strides = array<i32>} : memref<16x128xf32, #tpu.memory_space<vmem>>, vector<16x128xf32>,
    return
  }
  func.func @transform_0(%arg0: i32) -> (i32, i32) {
    %c0_i32 = arith.constant 0 : i32
    %c0_i32_0 = arith.constant 0 : i32
    return %arg0, %c0_i32 : i32, i32
  }
  func.func @transform_1(%arg0: i32) -> (i32, i32) {
    %c0_i32 = arith.constant 0 : i32
    %c0_i32_0 = arith.constant 0 : i32
    %c0_i32_1 = arith.constant 0 : i32
    return %c0_i32, %c0_i32_0 : i32, i32
  }
  func.func @transform_2(%arg0: i32) -> (i32, i32) {
    %c0_i32 = arith.constant 0 : i32
    %c0_i32_0 = arith.constant 0 : i32
    return %arg0, %c0_i32 : i32, i32
  }
}

</mosaic_0001>

<llo_original>
// kernel: tpu_custom_call.1
$region0: #{tpu_custom_call.1}
  #allocation0 [shape = 'u32[]', space=smem, size = 0x4, offset = 0x4, fixed_abs, tag = 'smem constant byte address 0x4 - core index']
  #allocation1 [shape = 'u32[144,128]{1,0:T(1,128)}', space=vmem, size = 0x12000, scoped, tag = 'internal scratch']
  %s0 = inlined_call_operand.hbm [shape: f32[16,36], index: 0, kind: input, shape index: {}]
  %s1 = inlined_call_operand.hbm [shape: f32[36,128], index: 1, kind: input, shape index: {}]
  %s2 = inlined_call_operand.hbm [shape: f32[16,128], index: 2, kind: output, shape index: {}]
  %s3 = sld [smem:[#allocation0]]
  $region26: #{tpu_custom_call.1} parent=0
    _
  %s5 = ssub.s32 1, %s3
  %s6 = scalar_select 0, %s5, %s3
  $region1: #{tpu_custom_call.1} parent=0
    #allocation2 [shape = 'u8[8192]{0}', space=vmem, size = 0x2000, scoped, tag = 'input window, operand 0, single buffered']
    #allocation3 [shape = 's32[1]{0}', space=sflag, size = 0x4, scoped, tag = 'scoped memory for tpu_custom_call.1']
    #allocation4 [shape = 's32[1]{0}', space=sflag, size = 0x4, scoped, tag = 'scoped memory for tpu_custom_call.1']
    #allocation5 [shape = 'u8[20480]{0}', space=vmem, size = 0x5000, scoped, tag = 'input window, operand 1, single buffered']
    #allocation6 [shape = 's32[1]{0}', space=sflag, size = 0x4, scoped, tag = 'scoped memory for tpu_custom_call.1']
    #allocation7 [shape = 'u8[8192]{0}', space=vmem, size = 0x2000, scoped, tag = 'output window, operand 0, single buffered']
    %7 = vsyncpa [#allocation3], 0
    %8 = vsyncpa [#allocation6], 0
    %9 = vsyncpa [#allocation4], 0
    // Predicated region
    $region2: #{tpu_custom_call.1} parent=1 // pred_check
      _
    $region3: #{tpu_custom_call.1} parent=1 // pred_check_branch
      %11 = sbr.rel (0) target = $region5
    $region4: #{tpu_custom_call.1} parent=1 // pred_region
      %s13 = ssub.s32 256, 256
      %14 = vsyncadd [#allocation3], %s13
      %s15 = sshll.u32 [#allocation2], 4
      %s16 = int_to_ptr.vmem [resolvable:$true] %s15
      %21 = dma.hbm_to_vmem [thread:$0]  %s0, 256, %s16, [#allocation3], 128, 128, 8
    $region5: #{tpu_custom_call.1} parent=1 // pred_fallthru
      _
    // Predicated region
    $region6: #{tpu_custom_call.1} parent=1 // pred_check
      _
    $region7: #{tpu_custom_call.1} parent=1 // pred_check_branch
      %23 = sbr.rel (0) target = $region9
    $region8: #{tpu_custom_call.1} parent=1 // pred_region
      %s25 = ssub.s32 640, 640
      %26 = vsyncadd [#allocation6], %s25
      %s27 = sshll.u32 [#allocation5], 4
      %s28 = int_to_ptr.vmem [resolvable:$true] %s27
      %33 = dma.hbm_to_vmem [thread:$0]  %s1, 640, %s28, [#allocation6], 128, 128, 8
    $region9: #{tpu_custom_call.1} parent=1 // pred_fallthru
      _
    // Predicated region
    $region10: #{tpu_custom_call.1} parent=1 // pred_check
      _
    $region11: #{tpu_custom_call.1} parent=1 // pred_check_branch
      %35 = sbr.rel (0) target = $region13
    $region12: #{tpu_custom_call.1} parent=1 // pred_region
      %36 = dma.done [#allocation3], 256
    $region13: #{tpu_custom_call.1} parent=1 // pred_fallthru
      _
    // Predicated region
    $region14: #{tpu_custom_call.1} parent=1 // pred_check
      _
    $region15: #{tpu_custom_call.1} parent=1 // pred_check_branch
      %38 = sbr.rel (0) target = $region17
    $region16: #{tpu_custom_call.1} parent=1 // pred_region
      %39 = dma.done [#allocation6], 640
    $region17: #{tpu_custom_call.1} parent=1 // pred_fallthru
      _
    %v40 = vld [vmem:[#allocation2] sm:$0xff]
    %v41 = vld [vmem:[#allocation2 + $0x8] sm:$0xff]
    %v42 = vld [vmem:[#allocation5] sm:$0xff]
    %v43 = vld [vmem:[#allocation5 + $0x8] sm:$0xff]
    %v44 = vld [vmem:[#allocation5 + $0x10] sm:$0xff]
    %v45 = vld [vmem:[#allocation5 + $0x18] sm:$0xff]
    %v46 = vld [vmem:[#allocation5 + $0x20] sm:$0xf]
    %vm47 = vcmask 293888
    %v49 = vsel %vm47, %v40, 0
    %v52 = vsel %vm47, %v41, 0
    %vm54 = vcmask 1043456
    %v56 = vsel %vm54, %v46, 0
    %58 = vmatprep.subr.mxu0 0.0
    %59 = vmatpush1.msra.mxu0 %v42
    %60 = vmatprep.subr.mxu0 0.0
    %61 = vmatpush1.msra.mxu0 %v43
    %62 = vmatprep.subr.mxu0 0.0
    %63 = vmatpush1.msra.mxu0 %v44
    %64 = vmatprep.subr.mxu0 0.0
    %65 = vmatpush1.msra.mxu0 %v45
    %66 = vmatprep.subr.mxu0 0.0
    %67 = vmatpush1.msra.mxu0 %v56
    %68 = vmatprep.subr.mxu0 0.0
    %69 = vmatpush1.msra.mxu0 0.0
    %70 = vmatprep.subr.mxu0 0.0
    %71 = vmatpush1.msra.mxu0 0.0
    %72 = vmatprep.subr.mxu0 0.0
    %73 = vmatpush1.msra.mxu0 0.0
    %74 = vmatprep.subr.mxu0 0.0
    %75 = vmatpush1.msra.mxu0 0.0
    %76 = vmatprep.subr.mxu0 0.0
    %77 = vmatpush1.msra.mxu0 0.0
    %78 = vmatprep.subr.mxu0 0.0
    %79 = vmatpush1.msra.mxu0 0.0
    %80 = vmatprep.subr.mxu0 0.0
    %81 = vmatpush1.msra.mxu0 0.0
    %82 = vmatprep.subr.mxu0 0.0
    %83 = vmatpush1.msra.mxu0 0.0
    %84 = vmatprep.subr.mxu0 0.0
    %85 = vmatpush1.msra.mxu0 0.0
    %86 = vmatprep.subr.mxu0 0.0
    %87 = vmatpush1.msra.mxu0 0.0
    %88 = vmatprep.subr.mxu0 0.0
    %89 = vmatpush1.msra.mxu0 0.0
    %90 = vmatprep.subr.mxu0 0.0
    %91 = vmatpush1.msra.mxu0 0.0
    %92 = vmatprep.subr.mxu0 0.0
    %93 = vmatpush1.msra.mxu0 0.0
    %94 = vmatprep.subr.mxu0 0.0
    %95 = vmatpush1.msra.mxu0 0.0
    %96 = vmatprep.subr.mxu0 0.0
    %97 = vmatpush1.msra.mxu0 0.0
    %98 = vmatprep.subr.mxu0 0.0
    %99 = vmatpush1.msra.mxu0 0.0
    %100 = vmatprep.subr.mxu0 0.0
    %101 = vmatpush1.msra.mxu0 0.0
    %102 = vmatprep.subr.mxu0 0.0
    %103 = vmatpush1.msra.mxu0 0.0
    %104 = vmatprep.subr.mxu0 0.0
    %105 = vmatpush1.msra.mxu0 0.0
    %106 = vmatprep.subr.mxu0 0.0
    %107 = vmatpush1.msra.mxu0 0.0
    %108 = vmatprep.subr.mxu0 0.0
    %109 = vmatpush1.msra.mxu0 0.0
    %110 = vmatprep.subr.mxu0 0.0
    %111 = vmatpush1.msra.mxu0 0.0
    %112 = vmatprep.subr.mxu0 0.0
    %113 = vmatpush1.msra.mxu0 0.0
    %114 = vmatprep.subr.mxu0 0.0
    %115 = vmatpush1.msra.mxu0 0.0
    %116 = vmatprep.subr.mxu0 0.0
    %117 = vmatpush1.msra.mxu0 0.0
    %118 = vmatprep.subr.mxu0 0.0
    %119 = vmatpush1.msra.mxu0 0.0
    %120 = vmatprep.subr.mxu0 0.0
    %121 = vmatpush1.msra.mxu0 0.0
    %122 = vmatprep.mubr.f32.mxu0 0.0
    %123 = vmatmul.mubr.f32.gmra.mrb[0].mxu0 %v49
    %v124 = vpop.f32.mrb[0].mxu0
    %v125 = vadd.f32 0.0, %v124
    %v126 = vpop.f32.mrb[0].mxu0
    %127 = vmatprep.mubr.f32.mxu0 0.0
    %128 = vmatmul.mubr.f32.gmra.mrb[0].mxu0 %v52
    %v129 = vpop.f32.mrb[0].mxu0
    %v130 = vadd.f32 0.0, %v129
    %v131 = vpop.f32.mrb[0].mxu0
    %132 = vdwg.mxu0
    %133 = vst [vmem:[#allocation7] sm:$0xff] %v125
    %134 = vst [vmem:[#allocation7 + $0x8] sm:$0xff] %v130
    // Predicated region
    $region18: #{tpu_custom_call.1} parent=1 // pred_check
      _
    $region19: #{tpu_custom_call.1} parent=1 // pred_check_branch
      %136 = sbr.rel (0) target = $region21
    $region20: #{tpu_custom_call.1} parent=1 // pred_region
      %s138 = ssub.s32 256, 256
      %139 = vsyncadd [#allocation4], %s138
      %s140 = sshll.u32 [#allocation7], 4
      %s141 = int_to_ptr.vmem [resolvable:$true] %s140
      %146 = dma.vmem_to_hbm [thread:$0]  %s141, 256, %s2, [#allocation4], 128, 128, 8
    $region21: #{tpu_custom_call.1} parent=1 // pred_fallthru
      _
    // Predicated region
    $region22: #{tpu_custom_call.1} parent=1 // pred_check
      _
    $region23: #{tpu_custom_call.1} parent=1 // pred_check_branch
      %148 = sbr.rel (0) target = $region25
    $region24: #{tpu_custom_call.1} parent=1 // pred_region
      %149 = dma.done [#allocation4], 256
    $region25: #{tpu_custom_call.1} parent=1 // pred_fallthru
      _
    %150 = vsyncpa [#allocation3], 1
    %151 = vsyncpa [#allocation6], 1
    %152 = vsyncpa [#allocation4], 1

</llo_original>
